<compile_context>
chip_gen: v5e
topology: v5e:2x2
jax: 0.10.0
libtpu: 0.0.40
codegen_flags: <defaults>
</compile_context>

<pallas_src>
import jax
import jax.numpy as jnp
from jax.experimental import pallas as pl
from jax.experimental.pallas import tpu as pltpu

_SUBLANE = 8


def _round_up(n, m):
    return ((n + m - 1) // m) * m


def _mlp_kernel(x_ref, w1_ref, b1_ref, w2_ref, b2_ref, o_ref):
    # x tile: [TB, D_in]; weights/biases are resident in VMEM across grid steps.
    x = x_ref[...]

    # fc1 + ReLU. MXU matmul with f32 accumulation; epilogue in f32.
    h = jnp.dot(x, w1_ref[...], preferred_element_type=jnp.float32)   # [TB, H]
    h = jnp.maximum(h + b1_ref[...], 0.0)

    # fc2 (cast the activation to the weight dtype only at the matmul operand).
    y = jnp.dot(h.astype(w2_ref.dtype), w2_ref[...],
                preferred_element_type=jnp.float32)                    # [TB, F]
    y = y + b2_ref[...]

    # F.normalize(p=2, dim=1): y / max(||y||, 1e-12) == y * rsqrt(max(||y||^2, 1e-24)).
    norm2 = jnp.maximum(jnp.sum(y * y, axis=-1, keepdims=True), 1e-24)
    o_ref[...] = (y * jax.lax.rsqrt(norm2)).astype(o_ref.dtype)


def _vmem_budget_bytes(tb, d_in, hidden, feat, in_itemsize):
    est = (2 * tb * d_in * in_itemsize                      # x double buffer
           + 2 * tb * feat * 4                              # output double buffer
           + 2 * (d_in * hidden + hidden * feat) * in_itemsize  # resident weights
           + tb * hidden * 4 + tb * feat * 4)               # h / y intermediates
    est = 4 * est + (4 << 20)                               # generous headroom
    # Stay within v5e scoped default growth and v7x physical VMEM (64 MiB).
    return max(16 << 20, min(est, 64 << 20))


def mlp_forward(x, w1, b1, w2, b2, *, block_b=2048, cast_to_bf16=False):
    """x: [B, input_dim]; w1: [input_dim, 2*feat]; b1: [1, 2*feat];
    w2: [2*feat, feat]; b2: [1, feat]. Returns [B, feat] float32."""
    B, d_in = x.shape
    hidden = w1.shape[1]
    feat = w2.shape[1]

    if cast_to_bf16:
        # Halve the dominant HBM stream (x) and the MXU operand width; biases and the
        # whole epilogue stay f32 (important on v5e which has no bf16 VPU/EUP).
        x = x.astype(jnp.bfloat16)
        w1 = w1.astype(jnp.bfloat16)
        w2 = w2.astype(jnp.bfloat16)
    b1 = b1.astype(jnp.float32)
    b2 = b2.astype(jnp.float32)

    in_itemsize = jnp.dtype(x.dtype).itemsize

    # Batch tile: balanced tiles, at least 2 of them when B is large enough (v7x megacore),
    # sized up to block_b to amortize per-grid-step overhead. bf16 wants sublane multiples of 16.
    n_tiles = max(1, pl.cdiv(B, block_b))
    if n_tiles == 1 and B > 256:
        n_tiles = 2
    row_mult = 16 if x.dtype == jnp.bfloat16 else _SUBLANE
    tb = _round_up(pl.cdiv(B, n_tiles), row_mult)
    grid = (pl.cdiv(B, tb),)  # ragged last block: OOB rows masked on write.

    # Cost estimate with UNPADDED traffic; weights/biases counted once (resident).
    flops = 2 * B * d_in * hidden + 2 * B * hidden * feat + 4 * B * feat
    bytes_accessed = (B * d_in * in_itemsize + B * feat * 4
                      + (d_in * hidden + hidden * feat) * in_itemsize
                      + (hidden + feat) * 4)

    out = pl.pallas_call(
        _mlp_kernel,
        out_shape=jax.ShapeDtypeStruct((B, feat), jnp.float32),
        grid=grid,
        in_specs=[
            pl.BlockSpec((tb, d_in), lambda i: (i, 0)),       # batch-tiled activations
            pl.BlockSpec((d_in, hidden), lambda i: (0, 0)),   # W1 resident in VMEM
            pl.BlockSpec((1, hidden), lambda i: (0, 0)),      # b1 resident
            pl.BlockSpec((hidden, feat), lambda i: (0, 0)),   # W2 resident
            pl.BlockSpec((1, feat), lambda i: (0, 0)),        # b2 resident
        ],
        out_specs=pl.BlockSpec((tb, feat), lambda i: (i, 0)),
        compiler_params=pltpu.CompilerParams(
            dimension_semantics=("parallel",),
            vmem_limit_bytes=_vmem_budget_bytes(tb, d_in, hidden, feat, in_itemsize)),
        cost_estimate=pl.CostEstimate(
            flops=flops, transcendentals=B, bytes_accessed=bytes_accessed),
    )(x, w1, b1, w2, b2)

    return out


def init_params(key, input_dim=16, feat_dim=16):
    """Deterministic init mimicking nn.Linear's U(-1/sqrt(fan_in), 1/sqrt(fan_in))."""
    k1, k2, k3, k4 = jax.random.split(key, 4)
    hidden = 2 * feat_dim
    bound1 = 1.0 / jnp.sqrt(input_dim)
    bound2 = 1.0 / jnp.sqrt(hidden)
    w1 = jax.random.uniform(k1, (input_dim, hidden), jnp.float32, -bound1, bound1)
    b1 = jax.random.uniform(k2, (1, hidden), jnp.float32, -bound1, bound1)
    w2 = jax.random.uniform(k3, (hidden, feat_dim), jnp.float32, -bound2, bound2)
    b2 = jax.random.uniform(k4, (1, feat_dim), jnp.float32, -bound2, bound2)
    return w1, b1, w2, b2


def mlp_reference(x, w1, b1, w2, b2):
    h = jnp.maximum(x @ w1 + b1, 0.0)
    y = h @ w2 + b2
    norm = jnp.maximum(jnp.linalg.norm(y, axis=1, keepdims=True), 1e-12)
    return y / norm


if __name__ == "__main__":
    key = jax.random.PRNGKey(0)
    kx, kp, kx2 = jax.random.split(key, 3)

    B, input_dim, feat_dim = 8, 16, 16
    x = jax.random.normal(kx, (B, input_dim), jnp.float32)
    w1, b1, w2, b2 = init_params(kp, input_dim=input_dim, feat_dim=feat_dim)

    # Small-batch check (single grid step, no padding anywhere).
    out = jax.block_until_ready(mlp_forward(x, w1, b1, w2, b2))
    ref = mlp_reference(x, w1, b1, w2, b2)
    assert out.shape == (B, feat_dim)
    assert jnp.allclose(out, ref, atol=1e-5, rtol=1e-5)

    # Larger batch exercises the multi-tile grid with a ragged last block (600 -> 2x304 tiles).
    B2 = 600
    x2 = jax.random.normal(kx2, (B2, input_dim), jnp.float32)
    out2 = jax.block_until_ready(mlp_forward(x2, w1, b1, w2, b2))
    ref2 = mlp_reference(x2, w1, b1, w2, b2)
    assert out2.shape == (B2, feat_dim)
    assert jnp.allclose(out2, ref2, atol=1e-5, rtol=1e-5)

    # Optional bf16 input path (v6e/v7x bandwidth win); f32 accumulation + f32 epilogue,
    # so results stay close to the f32 reference (loose tolerance, expected).
    out3 = jax.block_until_ready(mlp_forward(x2, w1, b1, w2, b2, cast_to_bf16=True))
    assert out3.shape == (B2, feat_dim)
    assert jnp.all(jnp.isfinite(out3))
    assert jnp.allclose(out3, ref2, atol=5e-2, rtol=5e-2)

    print("KERNEL_OK")
</pallas_src>

<mosaic_0001>
module attributes {stable_mosaic.version = 11 : i64} {
  func.func @_mlp_kernel(%arg0: i32, %arg1: memref<8x16xf32, #tpu.memory_space<vmem>>, %arg2: memref<16x32xf32, #tpu.memory_space<vmem>>, %arg3: memref<1x32xf32, #tpu.memory_space<vmem>>, %arg4: memref<32x16xf32, #tpu.memory_space<vmem>>, %arg5: memref<1x16xf32, #tpu.memory_space<vmem>>, %arg6: memref<8x16xf32, #tpu.memory_space<vmem>>) attributes {dimension_semantics = [#tpu.dimension_semantics<parallel>], iteration_bounds = array<i64: 1>, scalar_prefetch = 0 : i64, scratch_operands = 0 : i64, tpu.core_type = #tpu.core_type<tc>, window_params = [{transform_indices = @transform_0, window_bounds = array<i64: 8, 16>}, {pipeline_mode = #tpu.pipeline_mode<synchronous>, transform_indices = @transform_1, window_bounds = array<i64: 16, 32>}, {pipeline_mode = #tpu.pipeline_mode<synchronous>, transform_indices = @transform_2, window_bounds = array<i64: 1, 32>}, {pipeline_mode = #tpu.pipeline_mode<synchronous>, transform_indices = @transform_3, window_bounds = array<i64: 32, 16>}, {pipeline_mode = #tpu.pipeline_mode<synchronous>, transform_indices = @transform_4, window_bounds = array<i64: 1, 16>}, {transform_indices = @transform_5, window_bounds = array<i64: 8, 16>}]} {
    %c0 = arith.constant 0 : index
    %c0_0 = arith.constant 0 : index
    %0 = vector.load %arg1[%c0, %c0_0] : memref<8x16xf32, #tpu.memory_space<vmem>>, vector<8x16xf32>
    %c0_1 = arith.constant 0 : index
    %c0_2 = arith.constant 0 : index
    %1 = vector.load %arg2[%c0_1, %c0_2] : memref<16x32xf32, #tpu.memory_space<vmem>>, vector<16x32xf32>
    %cst = arith.constant dense<0.000000e+00> : vector<8x32xf32>
    %2 = tpu.matmul %0, %1, %cst {dimension_numbers = #tpu.dot_dimension_numbers<[1], [0], [0], [1], [0, 0, 1, 1], [], []>} : vector<8x16xf32>, vector<16x32xf32>, vector<8x32xf32> -> vector<8x32xf32>
    %c0_3 = arith.constant 0 : index
    %c0_4 = arith.constant 0 : index
    %3 = vector.load %arg3[%c0_3, %c0_4] : memref<1x32xf32, #tpu.memory_space<vmem>>, vector<1x32xf32>
    %4 = vector.broadcast %3 : vector<1x32xf32> to vector<8x32xf32>
    %5 = arith.addf %2, %4 : vector<8x32xf32>
    %cst_5 = arith.constant 0.000000e+00 : f32
    %6 = vector.broadcast %cst_5 : f32 to vector<8x32xf32>
    %7 = arith.maximumf %5, %6 : vector<8x32xf32>
    %c0_6 = arith.constant 0 : index
    %c0_7 = arith.constant 0 : index
    %8 = vector.load %arg4[%c0_6, %c0_7] : memref<32x16xf32, #tpu.memory_space<vmem>>, vector<32x16xf32>
    %cst_8 = arith.constant dense<0.000000e+00> : vector<8x16xf32>
    %9 = tpu.matmul %7, %8, %cst_8 {dimension_numbers = #tpu.dot_dimension_numbers<[1], [0], [0], [1], [0, 0, 1, 1], [], []>} : vector<8x32xf32>, vector<32x16xf32>, vector<8x16xf32> -> vector<8x16xf32>
    %c0_9 = arith.constant 0 : index
    %c0_10 = arith.constant 0 : index
    %10 = vector.load %arg5[%c0_9, %c0_10] : memref<1x16xf32, #tpu.memory_space<vmem>>, vector<1x16xf32>
    %11 = vector.broadcast %10 : vector<1x16xf32> to vector<8x16xf32>
    %12 = arith.addf %9, %11 : vector<8x16xf32>
    %13 = arith.mulf %12, %12 : vector<8x16xf32>
    %cst_11 = arith.constant dense<0.000000e+00> : vector<8xf32>
    %14 = vector.multi_reduction <add>, %13, %cst_11 [1] : vector<8x16xf32> to vector<8xf32>
    %15 = vector.shape_cast %14 : vector<8xf32> to vector<8x1xf32>
    %cst_12 = arith.constant 1.000000e-24 : f32
    %16 = vector.broadcast %cst_12 : f32 to vector<8x1xf32>
    %17 = arith.maximumf %15, %16 : vector<8x1xf32>
    %18 = math.rsqrt %17 : vector<8x1xf32>
    %19 = vector.broadcast %18 : vector<8x1xf32> to vector<8x16xf32>
    %20 = arith.mulf %12, %19 : vector<8x16xf32>
    %c0_13 = arith.constant 0 : index
    %c0_14 = arith.constant 0 : index
    %21 = vector.load %arg6[%c0_13, %c0_14] : memref<8x16xf32, #tpu.memory_space<vmem>>, vector<8x16xf32>
    tpu.vector_store %arg6[%c0_13, %c0_14], %20 {strides = array<i32>} : memref<8x16xf32, #tpu.memory_space<vmem>>, vector<8x16xf32>,
    return
  }
  func.func @transform_0(%arg0: i32) -> (i32, i32) {
    %c0_i32 = arith.constant 0 : i32
    %c0_i32_0 = arith.constant 0 : i32
    return %arg0, %c0_i32 : i32, i32
  }
  func.func @transform_1(%arg0: i32) -> (i32, i32) {
    %c0_i32 = arith.constant 0 : i32
    %c0_i32_0 = arith.constant 0 : i32
    %c0_i32_1 = arith.constant 0 : i32
    return %c0_i32, %c0_i32_0 : i32, i32
  }
  func.func @transform_2(%arg0: i32) -> (i32, i32) {
    %c0_i32 = arith.constant 0 : i32
    %c0_i32_0 = arith.constant 0 : i32
    %c0_i32_1 = arith.constant 0 : i32
    return %c0_i32, %c0_i32_0 : i32, i32
  }
  func.func @transform_3(%arg0: i32) -> (i32, i32) {
    %c0_i32 = arith.constant 0 : i32
    %c0_i32_0 = arith.constant 0 : i32
    %c0_i32_1 = arith.constant 0 : i32
    return %c0_i32, %c0_i32_0 : i32, i32
  }
  func.func @transform_4(%arg0: i32) -> (i32, i32) {
    %c0_i32 = arith.constant 0 : i32
    %c0_i32_0 = arith.constant 0 : i32
    %c0_i32_1 = arith.constant 0 : i32
    return %c0_i32, %c0_i32_0 : i32, i32
  }
  func.func @transform_5(%arg0: i32) -> (i32, i32) {
    %c0_i32 = arith.constant 0 : i32
    %c0_i32_0 = arith.constant 0 : i32
    return %arg0, %c0_i32 : i32, i32
  }
}

</mosaic_0001>

<llo_original>
// kernel: tpu_custom_call.1
$region0: #{tpu_custom_call.1}
  #allocation0 [shape = 'u32[]', space=smem, size = 0x4, offset = 0x4, fixed_abs, tag = 'smem constant byte address 0x4 - core index']
  #allocation1 [shape = 'u32[72,128]{1,0:T(1,128)}', space=vmem, size = 0x9000, scoped, tag = 'internal scratch']
  %s0 = inlined_call_operand.vmem [shape: f32[8,16], index: 0, kind: input, shape index: {}]
  %s1 = inlined_call_operand.vmem [shape: f32[16,32], index: 1, kind: input, shape index: {}]
  %s2 = inlined_call_operand.vmem [shape: f32[1,32], index: 2, kind: input, shape index: {}]
  %s3 = inlined_call_operand.vmem [shape: f32[32,16], index: 3, kind: input, shape index: {}]
  %s4 = inlined_call_operand.vmem [shape: f32[1,16], index: 4, kind: input, shape index: {}]
  %s5 = inlined_call_operand.hbm [shape: f32[8,16], index: 5, kind: output, shape index: {}]
  %s6 = sld [smem:[#allocation0]]
  $region30: #{tpu_custom_call.1} parent=0
    _
  %s8 = ssub.s32 1, %s6
  %s9 = scalar_select 0, %s8, %s6
  $region1: #{tpu_custom_call.1} parent=0
    #allocation2 [shape = 'u8[4096]{0}', space=vmem, size = 0x1000, scoped, tag = 'output window, operand 0, single buffered']
    #allocation3 [shape = 's32[1]{0}', space=sflag, size = 0x4, scoped, tag = 'scoped memory for tpu_custom_call.1']
    %10 = vsyncpa [#allocation3], 0
    // Predicated region
    $region2: #{tpu_custom_call.1} parent=1 // pred_check
      _
    $region3: #{tpu_custom_call.1} parent=1 // pred_check_branch
      %12 = sbr.rel (0) target = $region5
    $region4: #{tpu_custom_call.1} parent=1 // pred_region
      _
    $region5: #{tpu_custom_call.1} parent=1 // pred_fallthru
      _
    // Predicated region
    $region6: #{tpu_custom_call.1} parent=1 // pred_check
      _
    $region7: #{tpu_custom_call.1} parent=1 // pred_check_branch
      %14 = sbr.rel (0) target = $region9
    $region8: #{tpu_custom_call.1} parent=1 // pred_region
      _
    $region9: #{tpu_custom_call.1} parent=1 // pred_fallthru
      _
    // Predicated region
    $region10: #{tpu_custom_call.1} parent=1 // pred_check
      _
    $region11: #{tpu_custom_call.1} parent=1 // pred_check_branch
      %16 = sbr.rel (0) target = $region13
    $region12: #{tpu_custom_call.1} parent=1 // pred_region
      _
    $region13: #{tpu_custom_call.1} parent=1 // pred_fallthru
      _
    // Predicated region
    $region14: #{tpu_custom_call.1} parent=1 // pred_check
      _
    $region15: #{tpu_custom_call.1} parent=1 // pred_check_branch
      %18 = sbr.rel (0) target = $region17
    $region16: #{tpu_custom_call.1} parent=1 // pred_region
      _
    $region17: #{tpu_custom_call.1} parent=1 // pred_fallthru
      _
    // Predicated region
    $region18: #{tpu_custom_call.1} parent=1 // pred_check
      _
    $region19: #{tpu_custom_call.1} parent=1 // pred_check_branch
      %20 = sbr.rel (0) target = $region21
    $region20: #{tpu_custom_call.1} parent=1 // pred_region
      _
    $region21: #{tpu_custom_call.1} parent=1 // pred_fallthru
      _
    %v21 = vld [vmem:[%s0] sm:$0xff]
    %v22 = vld [vmem:[%s1] sm:$0xff]
    %v23 = vld [vmem:[%s1 + $0x8] sm:$0xff]
    %v24 = vld [vmem:[%s2] sm:$0x1]
    %v26 = vperm.slane %v24, 0
    %vm28 = vcmask 130048
    %v30 = vsel %vm28, %v21, 0
    %32 = vmatpush.msra.mxu0 0.0
    %33 = vmatpush.msra.mxu0 0.0
    %34 = vmatpush.msra.mxu0 0.0
    %35 = vmatpush.msra.mxu0 0.0
    %36 = vmatpush.msra.mxu0 0.0
    %37 = vmatpush.msra.mxu0 0.0
    %38 = vmatpush.msra.mxu0 0.0
    %39 = vmatpush.msra.mxu0 0.0
    %40 = vmatpush.msra.mxu0 0.0
    %41 = vmatpush.msra.mxu0 0.0
    %42 = vmatpush.msra.mxu0 0.0
    %43 = vmatpush.msra.mxu0 0.0
    %44 = vmatpush.msra.mxu0 0.0
    %45 = vmatpush.msra.mxu0 0.0
    %46 = vmatpush.msra.mxu0 %v23
    %47 = vmatpush.msra.mxu0 %v22
    %48 = vmatmul.f32.gmra.mxu0 %v30
    %v49 = vpop.f32.mrf.mxu0
    %v50 = vadd.f32 %v26, %v49
    %51 = vdwg.mxu0
    %v52 = vmax.f32 %v50, 0.0
    %v53 = vld [vmem:[%s3] sm:$0xff]
    %v54 = vld [vmem:[%s3 + $0x8] sm:$0xff]
    %v55 = vld [vmem:[%s3 + $0x10] sm:$0xff]
    %v56 = vld [vmem:[%s3 + $0x18] sm:$0xff]
    %v57 = vld [vmem:[%s4] sm:$0x1]
    %v59 = vperm.slane %v57, 0
    %vm61 = vcmask 261120
    %v63 = vsel %vm61, %v52, 0
    %65 = vmatpush.msra.mxu0 0.0
    %66 = vmatpush.msra.mxu0 0.0
    %67 = vmatpush.msra.mxu0 0.0
    %68 = vmatpush.msra.mxu0 0.0
    %69 = vmatpush.msra.mxu0 0.0
    %70 = vmatpush.msra.mxu0 0.0
    %71 = vmatpush.msra.mxu0 0.0
    %72 = vmatpush.msra.mxu0 0.0
    %73 = vmatpush.msra.mxu0 0.0
    %74 = vmatpush.msra.mxu0 0.0
    %75 = vmatpush.msra.mxu0 0.0
    %76 = vmatpush.msra.mxu0 0.0
    %77 = vmatpush.msra.mxu0 %v56
    %78 = vmatpush.msra.mxu0 %v55
    %79 = vmatpush.msra.mxu0 %v54
    %80 = vmatpush.msra.mxu0 %v53
    %81 = vmatmul.f32.gmra.mxu0 %v63
    %v82 = vpop.f32.mrf.mxu0
    %v83 = vadd.f32 %v59, %v82
    %84 = vdwg.mxu0
    %v85 = vmul.f32 %v83, %v83
    %v86 = vsel %vm28, %v85, 0.0
    %87 = vadd.xlane.f32.xlu0 %v86
    %v88 = vpop.xlane.xlu0 %87
    %v89 = vmax.f32 %v88, 1e-24
    %v90 = vrsqrt.pop %v89
    %v91 = vmul.f32 %v90, %v89
    %v92 = vmul.f32 %v91, %v90
    %v93 = vmul.f32 0.5, %v92
    %v94 = vsub.f32 1.5, %v93
    %v95 = vmul.f32 %v90, %v94
    %vm96 = vweird.f32 %v89
    %vm97 = vweird.f32 %v90
    %vm98 = vmor %vm96, %vm97
    %v99 = vsel %vm98, %v90, %v95
    %v100 = vmul.f32 %v83, %v99
    %101 = vst.msk [vmem:[#allocation2] sm:$0xff] %vm28, %v100
    // Predicated region
    $region22: #{tpu_custom_call.1} parent=1 // pred_check
      _
    $region23: #{tpu_custom_call.1} parent=1 // pred_check_branch
      %103 = sbr.rel (0) target = $region25
    $region24: #{tpu_custom_call.1} parent=1 // pred_region
      %105 = vsyncadd [#allocation3], 0
      %s107 = sshll.u32 [#allocation2], 4
      %s108 = int_to_ptr.vmem [resolvable:$true] %s107
      %s109 = sshll.u32 %s5, 4
      %s110 = int_to_ptr.hbm [resolvable:$true] %s109
      %112 = dma.vmem_to_hbm [thread:$0]  %s108, 128, %s110, [#allocation3]
    $region25: #{tpu_custom_call.1} parent=1 // pred_fallthru
      _
    // Predicated region
    $region26: #{tpu_custom_call.1} parent=1 // pred_check
      _
    $region27: #{tpu_custom_call.1} parent=1 // pred_check_branch
      %114 = sbr.rel (0) target = $region29
    $region28: #{tpu_custom_call.1} parent=1 // pred_region
      %116 = dma.done [#allocation3], 128
    $region29: #{tpu_custom_call.1} parent=1 // pred_fallthru
      _
    %117 = vsyncpa [#allocation3], 1

</llo_original>
